<compile_context>
chip_gen: v5e
topology: v5e:2x2
jax: 0.10.0
libtpu: 0.0.40
codegen_flags: <defaults>
</compile_context>

<pallas_src>
import jax
import jax.numpy as jnp
from jax import lax
from jax.experimental import pallas as pl
from jax.experimental.pallas import tpu as pltpu


def _round_up(x, m):
    return ((x + m - 1) // m) * m


def _make_kernel(n_sub, sub):
    def ffnn_kernel(x_ref, w1t_ref, b1_ref, w2t_ref, b2_ref, w3_ref, b3_ref,
                    o_ref):
        # Tiny resident weights: loaded once per grid step (hoisted out of the
        # sub-chunk loop).
        w1t = w1t_ref[...]            # (h1, in)  bf16
        w2t = w2t_ref[...]            # (h2, h1)  bf16
        b1 = b1_ref[...]              # (h1, 1)   f32
        b2 = b2_ref[...]              # (h2, 1)   f32
        w3 = w3_ref[...]              # (h2, 1)   f32
        b3 = b3_ref[0]                # scalar    f32 (SMEM)

        # Walk the (tile_b, in) x tile in sub-chunks so the f32 intermediates
        # stay small regardless of how big the (pipelined) DMA tile is.
        @pl.loop(0, n_sub)
        def _(c):
            row0 = pl.multiple_of(c * sub, sub)
            # (sub, in) slice of the f32 x tile; cast to bf16 only at the MXU
            # feed (no wrapper-side convert pass over x).
            xc = x_ref[pl.ds(row0, sub), :].astype(jnp.bfloat16)
            # Layer 1, feature-major: (h1, in) . (sub, in)^T -> (h1, sub),
            # f32 accumulation on the MXU.
            h = lax.dot_general(w1t, xc, (((1,), (1,)), ((), ())),
                                preferred_element_type=jnp.float32)
            h = jnp.maximum(h + b1, 0.0)
            # Layer 2: (h2, h1) @ (h1, sub) -> (h2, sub).
            h = jnp.dot(w2t, h.astype(jnp.bfloat16),
                        preferred_element_type=jnp.float32)
            h = jnp.maximum(h + b2, 0.0)
            # Head hidden -> 1: VPU multiply + sublane (XLU) reduction gives a
            # lane-dense (1, sub) output row directly; scalar bias from SMEM.
            y = jnp.sum(h * w3, axis=0, keepdims=True) + b3
            o_ref[pl.ds(c, 1)] = jax.nn.sigmoid(y).astype(o_ref.dtype)

    return ffnn_kernel


def ffnn_forward(x, params, *, tile_b=16384, sub_rows=2048):
    """Run the whole MLP in one batch-tiled Pallas kernel.

    params = [(w1, b1), (w2, b2), (w3, b3)] with hidden weights stored
    (in, out); reference math: sigmoid(relu(relu(x@w1+b1)@w2+b2)@w3+b3).
    """
    (w1, b1), (w2, b2), (w3, b3) = params
    B, in_dim = x.shape
    h1 = w1.shape[1]
    h2 = w2.shape[1]

    # Resident weights, stored (out, in) so the kernel computes feature-major
    # (batch on the 128-lane axis). bf16 for the MXU; biases / head stay f32.
    w1_t = w1.T.astype(jnp.bfloat16)                    # (h1, in)
    w2_t = w2.T.astype(jnp.bfloat16)                    # (h2, h1)
    b1_c = b1.reshape(h1, 1).astype(jnp.float32)
    b2_c = b2.reshape(h2, 1).astype(jnp.float32)
    w3_c = w3.reshape(h2, 1).astype(jnp.float32)
    b3_s = b3.reshape(1).astype(jnp.float32)            # scalar, lives in SMEM

    # ---- tile sizing -------------------------------------------------------
    lane = 128
    b_ceil = _round_up(B, lane)                          # batch rounded to lanes
    sub = _round_up(min(sub_rows, b_ceil), lane)         # compute sub-chunk rows
    tb_max = _round_up(min(tile_b, b_ceil), sub)         # never bigger than batch
    tb_for8 = _round_up(pl.cdiv(b_ceil, 8), sub)         # aim for >= ~8 grid steps
    tb = max(sub, min(tb_max, max(tb_for8, 4 * sub)))    # keep >= 4*sub for DMA amortization
    n_sub = tb // sub
    num_tiles = pl.cdiv(B, tb)

    kernel = _make_kernel(n_sub, sub)

    flops = 2 * num_tiles * tb * (in_dim * h1 + h1 * h2 + h2)
    bytes_accessed = (int(x.size) * x.dtype.itemsize
                      + num_tiles * tb * 4
                      + (int(w1_t.size) + int(w2_t.size)) * 2
                      + (int(b1_c.size) + int(b2_c.size) + int(w3_c.size) + 1) * 4)

    out3d = pl.pallas_call(
        kernel,
        out_shape=jax.ShapeDtypeStruct((num_tiles, n_sub, sub), jnp.float32),
        grid=(num_tiles,),
        in_specs=[
            # x: one (tb, in_dim) tile per grid step, read straight from HBM in
            # its original dtype (partial tail block is clamped by the DMA).
            pl.BlockSpec((tb, in_dim), lambda i: (i, 0)),
            # Weights / biases: constant index_map -> resident across steps.
            pl.BlockSpec((h1, in_dim), lambda i: (0, 0)),
            pl.BlockSpec((h1, 1), lambda i: (0, 0)),
            pl.BlockSpec((h2, h1), lambda i: (0, 0)),
            pl.BlockSpec((h2, 1), lambda i: (0, 0)),
            pl.BlockSpec((h2, 1), lambda i: (0, 0)),
            # Scalar output bias in SMEM (whole array, untiled).
            pl.BlockSpec(memory_space=pltpu.MemorySpace.SMEM),
        ],
        # Lane-dense output rows; last two block dims equal the full array dims
        # so the (8,128) block constraint is satisfied for any n_sub.
        out_specs=pl.BlockSpec((None, n_sub, sub), lambda i: (i, 0, 0)),
        compiler_params=pltpu.CompilerParams(
            dimension_semantics=("parallel",),
            vmem_limit_bytes=32 * 1024 * 1024),
        cost_estimate=pl.CostEstimate(flops=flops,
                                      transcendentals=num_tiles * tb,
                                      bytes_accessed=bytes_accessed),
    )(x, w1_t, b1_c, w2_t, b2_c, w3_c, b3_s)

    # Rows past B (tail of the last tile) are garbage from the clamped DMA;
    # slice them off and restore the (B, 1) PyTorch output shape.
    return out3d.reshape(-1)[:B, None]


def init_params(key, input_dim, layers):
    """Shapes matching the PyTorch module: hidden Linear weights
    kaiming_normal_ (fan_in, gain sqrt(2)); biases PyTorch-default uniform.
    Weights are returned already transposed to (in, out)."""
    dims = [input_dim] + list(layers) + [1]
    params = []
    for din, dout in zip(dims[:-1], dims[1:]):
        key, kw, kb = jax.random.split(key, 3)
        std = jnp.sqrt(2.0 / din)                        # kaiming_normal_, fan_in
        w = jax.random.normal(kw, (din, dout), jnp.float32) * std
        bound = 1.0 / jnp.sqrt(float(din))
        b = jax.random.uniform(kb, (1, dout), jnp.float32, -bound, bound)
        params.append((w, b))
    return params


def ffnn_reference(x, params):
    """Pure-JAX f32 reference for correctness checking."""
    (w1, b1), (w2, b2), (w3, b3) = params
    h = jnp.maximum(x @ w1 + b1, 0.0)
    h = jnp.maximum(h @ w2 + b2, 0.0)
    return jax.nn.sigmoid(h @ w3 + b3)


if __name__ == "__main__":
    # FFNN(input_dim=32, criterion=BCELoss(), activation=nn.ReLU, layers=(32, 32))
    input_dim = 32
    hidden_layers = (32, 32)

    key = jax.random.PRNGKey(0)
    kx, kx2, kp = jax.random.split(key, 3)
    params = init_params(kp, input_dim, hidden_layers)

    # Small demo batch (single tile, partial boundary block).
    x = jax.random.normal(kx, (8, input_dim), jnp.float32)
    out = ffnn_forward(x, params)
    jax.block_until_ready(out)
    assert out.shape == (8, 1)
    assert bool(jnp.all((out >= 0.0) & (out <= 1.0)))     # sigmoid output range
    ref = ffnn_reference(x, params)
    assert bool(jnp.all(jnp.abs(out - ref) < 2e-2)), "mismatch vs reference (B=8)"

    # Slightly larger batch with small tiles to exercise the multi-tile /
    # multi-sub-chunk / ragged-tail paths of the same kernel.
    x2 = jax.random.normal(kx2, (1000, input_dim), jnp.float32)
    out2 = ffnn_forward(x2, params, tile_b=512, sub_rows=256)
    jax.block_until_ready(out2)
    assert out2.shape == (1000, 1)
    ref2 = ffnn_reference(x2, params)
    assert bool(jnp.all(jnp.abs(out2 - ref2) < 3e-2)), "mismatch vs reference (B=1000)"

    print("KERNEL_OK")
</pallas_src>

<mosaic_0001>
module attributes {stable_mosaic.version = 11 : i64} {
  func.func @ffnn_kernel(%arg0: i32, %arg1: memref<128x32xf32, #tpu.memory_space<vmem>>, %arg2: memref<32x32xbf16, #tpu.memory_space<vmem>>, %arg3: memref<32x1xf32, #tpu.memory_space<vmem>>, %arg4: memref<32x32xbf16, #tpu.memory_space<vmem>>, %arg5: memref<32x1xf32, #tpu.memory_space<vmem>>, %arg6: memref<32x1xf32, #tpu.memory_space<vmem>>, %arg7: memref<1xf32, #tpu.memory_space<smem>>, %arg8: memref<1x1x128xf32, #tpu.memory_space<vmem>>) attributes {dimension_semantics = [#tpu.dimension_semantics<parallel>], iteration_bounds = array<i64: 1>, scalar_prefetch = 0 : i64, scratch_operands = 0 : i64, tpu.core_type = #tpu.core_type<tc>, window_params = [{transform_indices = @transform_0, window_bounds = array<i64: 128, 32>}, {pipeline_mode = #tpu.pipeline_mode<synchronous>, transform_indices = @transform_1, window_bounds = array<i64: 32, 32>}, {pipeline_mode = #tpu.pipeline_mode<synchronous>, transform_indices = @transform_2, window_bounds = array<i64: 32, 1>}, {pipeline_mode = #tpu.pipeline_mode<synchronous>, transform_indices = @transform_3, window_bounds = array<i64: 32, 32>}, {pipeline_mode = #tpu.pipeline_mode<synchronous>, transform_indices = @transform_4, window_bounds = array<i64: 32, 1>}, {pipeline_mode = #tpu.pipeline_mode<synchronous>, transform_indices = @transform_5, window_bounds = array<i64: 32, 1>}, {transform_indices = @transform_6, window_bounds = array<i64: 1>}, {transform_indices = @transform_7, window_bounds = array<i64: 1, 1, 128>}]} {
    %c0 = arith.constant 0 : index
    %c0_0 = arith.constant 0 : index
    %0 = vector.load %arg2[%c0, %c0_0] : memref<32x32xbf16, #tpu.memory_space<vmem>>, vector<32x32xbf16>
    %c0_1 = arith.constant 0 : index
    %c0_2 = arith.constant 0 : index
    %1 = vector.load %arg4[%c0_1, %c0_2] : memref<32x32xbf16, #tpu.memory_space<vmem>>, vector<32x32xbf16>
    %c0_3 = arith.constant 0 : index
    %c0_4 = arith.constant 0 : index
    %2 = vector.load %arg3[%c0_3, %c0_4] : memref<32x1xf32, #tpu.memory_space<vmem>>, vector<32x1xf32>
    %c0_5 = arith.constant 0 : index
    %c0_6 = arith.constant 0 : index
    %3 = vector.load %arg5[%c0_5, %c0_6] : memref<32x1xf32, #tpu.memory_space<vmem>>, vector<32x1xf32>
    %c0_7 = arith.constant 0 : index
    %c0_8 = arith.constant 0 : index
    %4 = vector.load %arg6[%c0_7, %c0_8] : memref<32x1xf32, #tpu.memory_space<vmem>>, vector<32x1xf32>
    %c0_9 = arith.constant 0 : index
    %5 = memref.load %arg7[%c0_9] : memref<1xf32, #tpu.memory_space<smem>>
    %c0_i32 = arith.constant 0 : i32
    %c1_i32 = arith.constant 1 : i32
    %6 = arith.muli %c0_i32, %c1_i32 : i32
    %c0_i32_10 = arith.constant 0 : i32
    %7 = arith.addi %c0_i32_10, %6 : i32
    %c128_i32 = arith.constant 128 : i32
    %8 = arith.muli %7, %c128_i32 : i32
    %9 = tpu.assume_multiple %8, 128 : i32
    %10 = arith.index_cast %9 : i32 to index
    %c0_11 = arith.constant 0 : index
    %11 = vector.load %arg1[%10, %c0_11] : memref<128x32xf32, #tpu.memory_space<vmem>>, vector<128x32xf32>
    %12 = arith.truncf %11 : vector<128x32xf32> to vector<128x32xbf16>
    %cst = arith.constant dense<0.000000e+00> : vector<32x128xf32>
    %13 = tpu.matmul %0, %12, %cst {dimension_numbers = #tpu.dot_dimension_numbers<[1], [1], [0], [0], [0, 0, 1, 0], [], []>} : vector<32x32xbf16>, vector<128x32xbf16>, vector<32x128xf32> -> vector<32x128xf32>
    %14 = vector.broadcast %2 : vector<32x1xf32> to vector<32x128xf32>
    %15 = arith.addf %13, %14 : vector<32x128xf32>
    %cst_12 = arith.constant 0.000000e+00 : f32
    %16 = vector.broadcast %cst_12 : f32 to vector<32x128xf32>
    %17 = arith.maximumf %15, %16 : vector<32x128xf32>
    %18 = arith.truncf %17 : vector<32x128xf32> to vector<32x128xbf16>
    %cst_13 = arith.constant dense<0.000000e+00> : vector<32x128xf32>
    %19 = tpu.matmul %1, %18, %cst_13 {dimension_numbers = #tpu.dot_dimension_numbers<[1], [0], [0], [1], [0, 0, 1, 1], [], []>} : vector<32x32xbf16>, vector<32x128xbf16>, vector<32x128xf32> -> vector<32x128xf32>
    %20 = vector.broadcast %3 : vector<32x1xf32> to vector<32x128xf32>
    %21 = arith.addf %19, %20 : vector<32x128xf32>
    %cst_14 = arith.constant 0.000000e+00 : f32
    %22 = vector.broadcast %cst_14 : f32 to vector<32x128xf32>
    %23 = arith.maximumf %21, %22 : vector<32x128xf32>
    %24 = vector.broadcast %4 : vector<32x1xf32> to vector<32x128xf32>
    %25 = arith.mulf %23, %24 : vector<32x128xf32>
    %cst_15 = arith.constant dense<0.000000e+00> : vector<128xf32>
    %26 = vector.multi_reduction <add>, %25, %cst_15 [0] : vector<32x128xf32> to vector<128xf32>
    %27 = vector.shape_cast %26 : vector<128xf32> to vector<1x128xf32>
    %28 = vector.broadcast %5 : f32 to vector<1x128xf32>
    %29 = arith.addf %27, %28 : vector<1x128xf32>
    %30 = arith.negf %29 : vector<1x128xf32>
    %31 = math.exp %30 : vector<1x128xf32>
    %cst_16 = arith.constant 1.000000e+00 : f32
    %32 = vector.broadcast %cst_16 : f32 to vector<1x128xf32>
    %33 = arith.addf %32, %31 : vector<1x128xf32>
    %34 = arith.divf %32, %33 : vector<1x128xf32>
    %c0_17 = arith.constant 0 : index
    %35 = arith.index_cast %7 : i32 to index
    %c0_18 = arith.constant 0 : index
    %36 = vector.load %arg8[%c0_17, %35, %c0_18] : memref<1x1x128xf32, #tpu.memory_space<vmem>>, vector<1x1x128xf32>
    %37 = vector.shape_cast %36 : vector<1x1x128xf32> to vector<1x128xf32>
    %38 = vector.shape_cast %34 : vector<1x128xf32> to vector<1x1x128xf32>
    tpu.vector_store %arg8[%c0_17, %35, %c0_18], %38 {strides = array<i32>} : memref<1x1x128xf32, #tpu.memory_space<vmem>>, vector<1x1x128xf32>,
    %c1_i32_19 = arith.constant 1 : i32
    return
  }
  func.func @transform_0(%arg0: i32) -> (i32, i32) {
    %c0_i32 = arith.constant 0 : i32
    %c0_i32_0 = arith.constant 0 : i32
    return %arg0, %c0_i32 : i32, i32
  }
  func.func @transform_1(%arg0: i32) -> (i32, i32) {
    %c0_i32 = arith.constant 0 : i32
    %c0_i32_0 = arith.constant 0 : i32
    %c0_i32_1 = arith.constant 0 : i32
    return %c0_i32, %c0_i32_0 : i32, i32
  }
  func.func @transform_2(%arg0: i32) -> (i32, i32) {
    %c0_i32 = arith.constant 0 : i32
    %c0_i32_0 = arith.constant 0 : i32
    %c0_i32_1 = arith.constant 0 : i32
    return %c0_i32, %c0_i32_0 : i32, i32
  }
  func.func @transform_3(%arg0: i32) -> (i32, i32) {
    %c0_i32 = arith.constant 0 : i32
    %c0_i32_0 = arith.constant 0 : i32
    %c0_i32_1 = arith.constant 0 : i32
    return %c0_i32, %c0_i32_0 : i32, i32
  }
  func.func @transform_4(%arg0: i32) -> (i32, i32) {
    %c0_i32 = arith.constant 0 : i32
    %c0_i32_0 = arith.constant 0 : i32
    %c0_i32_1 = arith.constant 0 : i32
    return %c0_i32, %c0_i32_0 : i32, i32
  }
  func.func @transform_5(%arg0: i32) -> (i32, i32) {
    %c0_i32 = arith.constant 0 : i32
    %c0_i32_0 = arith.constant 0 : i32
    %c0_i32_1 = arith.constant 0 : i32
    return %c0_i32, %c0_i32_0 : i32, i32
  }
  func.func @transform_6(%arg0: i32) -> i32 {
    %c0_i32 = arith.constant 0 : i32
    %c0_i32_0 = arith.constant 0 : i32
    return %c0_i32 : i32
  }
  func.func @transform_7(%arg0: i32) -> (i32, i32, i32) {
    %c0_i32 = arith.constant 0 : i32
    %c0_i32_0 = arith.constant 0 : i32
    %c0_i32_1 = arith.constant 0 : i32
    return %arg0, %c0_i32, %c0_i32_0 : i32, i32, i32
  }
}

</mosaic_0001>

<llo_original>
// kernel: tpu_custom_call.1
$region0: #{tpu_custom_call.1}
  #allocation0 [shape = 'u32[]', space=smem, size = 0x4, offset = 0x4, fixed_abs, tag = 'smem constant byte address 0x4 - core index']
  #allocation1 [shape = 'u32[72,128]{1,0:T(1,128)}', space=vmem, size = 0x9000, scoped, tag = 'internal scratch']
  #allocation2 [shape = 'f32[1]{0:T(128)S(6)}', space=smem, size = 0x200, scoped, tag = 'scoped memory for tpu_custom_call.1']
  %s0 = inlined_call_operand.vmem [shape: f32[8,32], index: 0, kind: input, shape index: {}]
  %s1 = inlined_call_operand.vmem [shape: bf16[32,32], index: 1, kind: input, shape index: {}]
  %s2 = inlined_call_operand.vmem [shape: f32[32,1], index: 2, kind: input, shape index: {}]
  %s3 = inlined_call_operand.vmem [shape: bf16[32,32], index: 3, kind: input, shape index: {}]
  %s4 = inlined_call_operand.vmem [shape: f32[32,1], index: 4, kind: input, shape index: {}]
  %s5 = inlined_call_operand.vmem [shape: f32[32,1], index: 5, kind: input, shape index: {}]
  %s6 = inlined_call_operand.<no memory space> [shape: f32[1], index: 6, kind: input, shape index: {}]
  %s7 = inlined_call_operand.hbm [shape: f32[1,1,128], index: 7, kind: output, shape index: {}]
  %s8 = sld [smem:[#allocation0]]
  $region38: #{tpu_custom_call.1} parent=0
    _
  %s10 = ssub.s32 1, %s8
  %s11 = scalar_select 0, %s10, %s8
  %12 = sst [smem:[#allocation2]] %s6
  $region1: #{tpu_custom_call.1} parent=0
    #allocation3 [shape = 'u8[512]{0}', space=vmem, size = 0x400, scoped, tag = 'output window, operand 0, single buffered']
    #allocation4 [shape = 's32[1]{0}', space=sflag, size = 0x4, scoped, tag = 'scoped memory for tpu_custom_call.1']
    %13 = vsyncpa [#allocation4], 0
    // Predicated region
    $region2: #{tpu_custom_call.1} parent=1 // pred_check
      _
    $region3: #{tpu_custom_call.1} parent=1 // pred_check_branch
      %15 = sbr.rel (0) target = $region5
    $region4: #{tpu_custom_call.1} parent=1 // pred_region
      _
    $region5: #{tpu_custom_call.1} parent=1 // pred_fallthru
      _
    // Predicated region
    $region6: #{tpu_custom_call.1} parent=1 // pred_check
      _
    $region7: #{tpu_custom_call.1} parent=1 // pred_check_branch
      %17 = sbr.rel (0) target = $region9
    $region8: #{tpu_custom_call.1} parent=1 // pred_region
      _
    $region9: #{tpu_custom_call.1} parent=1 // pred_fallthru
      _
    // Predicated region
    $region10: #{tpu_custom_call.1} parent=1 // pred_check
      _
    $region11: #{tpu_custom_call.1} parent=1 // pred_check_branch
      %19 = sbr.rel (0) target = $region13
    $region12: #{tpu_custom_call.1} parent=1 // pred_region
      _
    $region13: #{tpu_custom_call.1} parent=1 // pred_fallthru
      _
    // Predicated region
    $region14: #{tpu_custom_call.1} parent=1 // pred_check
      _
    $region15: #{tpu_custom_call.1} parent=1 // pred_check_branch
      %21 = sbr.rel (0) target = $region17
    $region16: #{tpu_custom_call.1} parent=1 // pred_region
      _
    $region17: #{tpu_custom_call.1} parent=1 // pred_fallthru
      _
    // Predicated region
    $region18: #{tpu_custom_call.1} parent=1 // pred_check
      _
    $region19: #{tpu_custom_call.1} parent=1 // pred_check_branch
      %23 = sbr.rel (0) target = $region21
    $region20: #{tpu_custom_call.1} parent=1 // pred_region
      _
    $region21: #{tpu_custom_call.1} parent=1 // pred_fallthru
      _
    // Predicated region
    $region22: #{tpu_custom_call.1} parent=1 // pred_check
      _
    $region23: #{tpu_custom_call.1} parent=1 // pred_check_branch
      %25 = sbr.rel (0) target = $region25
    $region24: #{tpu_custom_call.1} parent=1 // pred_region
      _
    $region25: #{tpu_custom_call.1} parent=1 // pred_fallthru
      _
    // Predicated region
    $region26: #{tpu_custom_call.1} parent=1 // pred_check
      _
    $region27: #{tpu_custom_call.1} parent=1 // pred_check_branch
      %27 = sbr.rel (0) target = $region29
    $region28: #{tpu_custom_call.1} parent=1 // pred_region
      _
    $region29: #{tpu_custom_call.1} parent=1 // pred_fallthru
      _
    %v29 = vld [vmem:[%s1] sm:$0xf]
    %v30 = vld [vmem:[%s1 + $0x4] sm:$0xf]
    %v31 = vld [vmem:[%s1 + $0x8] sm:$0xf]
    %v32 = vld [vmem:[%s1 + $0xc] sm:$0xf]
    %v33 = vld [vmem:[%s3] sm:$0xf]
    %v34 = vld [vmem:[%s3 + $0x4] sm:$0xf]
    %v35 = vld [vmem:[%s3 + $0x8] sm:$0xf]
    %v36 = vld [vmem:[%s3 + $0xc] sm:$0xf]
    %v37 = vld [vmem:[%s2] sm:$0xff]
    %v38 = vld [vmem:[%s2 + $0x8] sm:$0xff]
    %v39 = vld [vmem:[%s2 + $0x10] sm:$0xff]
    %v40 = vld [vmem:[%s2 + $0x18] sm:$0xff]
    %v41 = vld [vmem:[%s4] sm:$0xff]
    %v42 = vld [vmem:[%s4 + $0x8] sm:$0xff]
    %v43 = vld [vmem:[%s4 + $0x10] sm:$0xff]
    %v44 = vld [vmem:[%s4 + $0x18] sm:$0xff]
    %v45 = vld [vmem:[%s5] sm:$0xff]
    %v46 = vld [vmem:[%s5 + $0x8] sm:$0xff]
    %v47 = vld [vmem:[%s5 + $0x10] sm:$0xff]
    %v48 = vld [vmem:[%s5 + $0x18] sm:$0xff]
    %s49 = sld [smem:[#allocation2]]
    %v50 = vld [vmem:[%s0] sm:$0xff]
    %v51 = vld [vmem:[%s0 + $0x8] sm:$0xff]
    %v52 = vld [vmem:[%s0 + $0x10] sm:$0xff]
    %v53 = vld [vmem:[%s0 + $0x18] sm:$0xff]
    %v54 = vld [vmem:[%s0 + $0x20] sm:$0xff]
    %v55 = vld [vmem:[%s0 + $0x28] sm:$0xff]
    %v56 = vld [vmem:[%s0 + $0x30] sm:$0xff]
    %v57 = vld [vmem:[%s0 + $0x38] sm:$0xff]
    %v58 = vld [vmem:[%s0 + $0x40] sm:$0xff]
    %v59 = vld [vmem:[%s0 + $0x48] sm:$0xff]
    %v60 = vld [vmem:[%s0 + $0x50] sm:$0xff]
    %v61 = vld [vmem:[%s0 + $0x58] sm:$0xff]
    %v62 = vld [vmem:[%s0 + $0x60] sm:$0xff]
    %v63 = vld [vmem:[%s0 + $0x68] sm:$0xff]
    %v64 = vld [vmem:[%s0 + $0x70] sm:$0xff]
    %v65 = vld [vmem:[%s0 + $0x78] sm:$0xff]
    %v66 = vpack.c.bf16 %v51, %v50
    %v67 = vpack.c.bf16 %v53, %v52
    %v68 = vpack.c.bf16 %v55, %v54
    %v69 = vpack.c.bf16 %v57, %v56
    %v70 = vpack.c.bf16 %v59, %v58
    %v71 = vpack.c.bf16 %v61, %v60
    %v72 = vpack.c.bf16 %v63, %v62
    %v73 = vpack.c.bf16 %v65, %v64
    %75 = vset.pattern.permute.xlu0 0
    %76 = vperm.xlu0 %75, %v37
    %v77 = vpop.permute.xlu0 %76
    %80 = vset.pattern.permute.xlu0 0
    %81 = vperm.xlu0 %80, %v38
    %v82 = vpop.permute.xlu0 %81
    %85 = vset.pattern.permute.xlu0 0
    %86 = vperm.xlu0 %85, %v39
    %v87 = vpop.permute.xlu0 %86
    %90 = vset.pattern.permute.xlu0 0
    %91 = vperm.xlu0 %90, %v40
    %v92 = vpop.permute.xlu0 %91
    %v98 = vunpack.c.l.b16 %v29
    %v99 = vunpack.c.l.b16 %v30
    %v100 = vunpack.c.l.b16 %v31
    %v101 = vunpack.c.l.b16 %v32
    %v102 = vpack.c.b16 %v99, %v98
    %v103 = vpack.c.b16 %v101, %v100
    %vm104 = vcmask 261120
    %v106 = vsel %vm104, %v102, 0
    %v109 = vsel %vm104, %v103, 0
    %v112 = vsel %vm104, %v66, 0
    %v115 = vsel %vm104, %v67, 0
    %v118 = vsel %vm104, %v68, 0
    %v121 = vsel %vm104, %v69, 0
    %v124 = vsel %vm104, %v70, 0
    %v127 = vsel %vm104, %v71, 0
    %v130 = vsel %vm104, %v72, 0
    %v133 = vsel %vm104, %v73, 0
    %135 = vmatpush.bf16.xpose.msra.mxu0 %v133
    %136 = vmatpush.bf16.xpose.msra.mxu0 %v130
    %137 = vmatpush.bf16.xpose.msra.mxu0 %v127
    %138 = vmatpush.bf16.xpose.msra.mxu0 %v124
    %139 = vmatpush.bf16.xpose.msra.mxu0 %v121
    %140 = vmatpush.bf16.xpose.msra.mxu0 %v118
    %141 = vmatpush.bf16.xpose.msra.mxu0 %v115
    %142 = vmatpush.bf16.xpose.msra.mxu0 %v112
    %143 = vmatmul.bf16.gmra.mxu0 %v106
    %v144 = vpop.f32.mrf.mxu0
    %v145 = vadd.f32 %v77, %v144
    %v146 = vpop.f32.mrf.mxu0
    %v147 = vadd.f32 %v82, %v146
    %148 = vmatmul.bf16.gmra.mxu0 %v109
    %v149 = vpop.f32.mrf.mxu0
    %v150 = vadd.f32 %v87, %v149
    %v151 = vpop.f32.mrf.mxu0
    %v152 = vadd.f32 %v92, %v151
    %153 = vdwg.mxu0
    %v154 = vmax.f32 %v145, 0.0
    %v155 = vmax.f32 %v147, 0.0
    %v156 = vmax.f32 %v150, 0.0
    %v157 = vmax.f32 %v152, 0.0
    %v158 = vpack.c.bf16 %v155, %v154
    %v159 = vpack.c.bf16 %v157, %v156
    %161 = vset.pattern.permute.xlu0 0
    %162 = vperm.xlu0 %161, %v41
    %v163 = vpop.permute.xlu0 %162
    %166 = vset.pattern.permute.xlu0 0
    %167 = vperm.xlu0 %166, %v42
    %v168 = vpop.permute.xlu0 %167
    %171 = vset.pattern.permute.xlu0 0
    %172 = vperm.xlu0 %171, %v43
    %v173 = vpop.permute.xlu0 %172
    %176 = vset.pattern.permute.xlu0 0
    %177 = vperm.xlu0 %176, %v44
    %v178 = vpop.permute.xlu0 %177
    %v184 = vunpack.c.l.b16 %v33
    %v185 = vunpack.c.l.b16 %v34
    %v186 = vunpack.c.l.b16 %v35
    %v187 = vunpack.c.l.b16 %v36
    %v188 = vpack.c.b16 %v185, %v184
    %v189 = vpack.c.b16 %v187, %v186
    %v191 = vsel %vm104, %v188, 0
    %v194 = vsel %vm104, %v189, 0
    %196 = vmatpush.bf16.msra.mxu0 0
    %197 = vmatpush.bf16.msra.mxu0 0
    %198 = vmatpush.bf16.msra.mxu0 0
    %199 = vmatpush.bf16.msra.mxu0 0
    %200 = vmatpush.bf16.msra.mxu0 0
    %201 = vmatpush.bf16.msra.mxu0 0
    %202 = vmatpush.bf16.msra.mxu0 %v159
    %203 = vmatpush.bf16.msra.mxu0 %v158
    %204 = vmatmul.bf16.gmra.mxu0 %v191
    %v205 = vpop.f32.mrf.mxu0
    %v206 = vadd.f32 %v163, %v205
    %v207 = vpop.f32.mrf.mxu0
    %v208 = vadd.f32 %v168, %v207
    %209 = vmatmul.bf16.gmra.mxu0 %v194
    %v210 = vpop.f32.mrf.mxu0
    %v211 = vadd.f32 %v173, %v210
    %v212 = vpop.f32.mrf.mxu0
    %v213 = vadd.f32 %v178, %v212
    %214 = vdwg.mxu0
    %v215 = vmax.f32 %v206, 0.0
    %v216 = vmax.f32 %v208, 0.0
    %v217 = vmax.f32 %v211, 0.0
    %v218 = vmax.f32 %v213, 0.0
    %220 = vset.pattern.permute.xlu0 0
    %221 = vperm.xlu0 %220, %v45
    %v222 = vpop.permute.xlu0 %221
    %225 = vset.pattern.permute.xlu0 0
    %226 = vperm.xlu0 %225, %v46
    %v227 = vpop.permute.xlu0 %226
    %230 = vset.pattern.permute.xlu0 0
    %231 = vperm.xlu0 %230, %v47
    %v232 = vpop.permute.xlu0 %231
    %235 = vset.pattern.permute.xlu0 0
    %236 = vperm.xlu0 %235, %v48
    %v237 = vpop.permute.xlu0 %236
    %v239 = vmul.f32 %v215, %v222
    %v240 = vmul.f32 %v216, %v227
    %v241 = vmul.f32 %v217, %v232
    %v242 = vmul.f32 %v218, %v237
    %v243 = vadd.f32 %v239, %v240
    %v244 = vadd.f32 %v243, %v241
    %v245 = vadd.f32 %v244, %v242
    %v246 = vrot.slane %v245, 4
    %v247 = vadd.f32 %v245, %v246
    %v248 = vrot.slane %v247, 2
    %v249 = vadd.f32 %v247, %v248
    %v250 = vrot.slane %v249, 1
    %v251 = vadd.f32 %v249, %v250
    %v252 = vstv %s49
    %v253 = vadd.f32 %v251, %v252
    %v254 = vxor.u32 %v253, 2147483648
    %v255 = vmul.f32 %v254, 1.442695
    %v256 = vpow.pop %v255
    %v257 = vadd.f32 %v256, 1.0
    %v258 = vrcp.pop %v257
    %v259 = vmul.f32 %v257, %v258
    %v260 = vsub.f32 1.0, %v259
    %v261 = vmul.f32 %v258, %v260
    %v262 = vadd.f32 %v258, %v261
    %vm263 = vweird.f32 %v257
    %vm264 = vweird.f32 %v258
    %vm265 = vmor %vm263, %vm264
    %v266 = vsel %vm265, %v258, %v262
    %v267 = vand.u32 2147483647, %v257
    %vm268 = vcmp.eq.f32.partialorder %v267, 8.507059e+37
    %v269 = vand.u32 %v257, 2147483648
    %v270 = vor.u32 1.1754944e-38, %v269
    %v271 = vsel %vm268, %v270, %v266
    %v272 = vmul.f32 1.0, %v271
    %273 = vst [vmem:[#allocation3] sm:$0x1] %v272
    // Predicated region
    $region30: #{tpu_custom_call.1} parent=1 // pred_check
      _
    $region31: #{tpu_custom_call.1} parent=1 // pred_check_branch
      %275 = sbr.rel (0) target = $region33
    $region32: #{tpu_custom_call.1} parent=1 // pred_region
      %277 = vsyncadd [#allocation4], 0
      %s279 = sshll.u32 [#allocation3], 4
      %s280 = int_to_ptr.vmem [resolvable:$true] %s279
      %s281 = sshll.u32 %s7, 4
      %s282 = int_to_ptr.hbm [resolvable:$true] %s281
      %284 = dma.vmem_to_hbm [thread:$0]  %s280, 16, %s282, [#allocation4]
    $region33: #{tpu_custom_call.1} parent=1 // pred_fallthru
      _
    // Predicated region
    $region34: #{tpu_custom_call.1} parent=1 // pred_check
      _
    $region35: #{tpu_custom_call.1} parent=1 // pred_check_branch
      %286 = sbr.rel (0) target = $region37
    $region36: #{tpu_custom_call.1} parent=1 // pred_region
      %288 = dma.done [#allocation4], 16
    $region37: #{tpu_custom_call.1} parent=1 // pred_fallthru
      _
    %289 = vsyncpa [#allocation4], 1

</llo_original>
